<compile_context>
chip_gen: v6e
topology: v6e:2x2x1
jax: 0.10.0
libtpu: 0.0.40
codegen_flags: <defaults>
</compile_context>

<pallas_src>
import functools

import jax
import jax.numpy as jnp
from jax.experimental import pallas as pl
from jax.experimental.pallas import tpu as pltpu


def _self_attention_kernel(x_ref, w_ref, b_ref, o_ref, *, is_residual, use_relu):
    # x_ref: (TB, S, D) VMEM    w_ref: (1, D) f32 VMEM    b_ref: (1, 1) f32 SMEM
    # o_ref: (TB, S, D) if is_residual else (TB, 1, D)
    x = x_ref[...]
    xf = x.astype(jnp.float32)                 # no-op for f32 inputs
    w = w_ref[...]                             # (1, D) f32, broadcasts over (TB, S, D)
    bias = b_ref[0, 0]

    # Linear(D, 1): f32 multiply + f32 lane reduce (VPU/XLU; an N=1 MXU matmul
    # would waste 127/128 output columns).
    scores = jnp.sum(xf * w, axis=-1, keepdims=True) + bias      # (TB, S, 1) f32

    scores = jnp.maximum(scores, 0.0) if use_relu else jnp.tanh(scores)

    # Softmax over the sequence axis (PyTorch dim=1), exact divide.
    m = jnp.max(scores, axis=1, keepdims=True)                   # (TB, 1, 1)
    e = jnp.exp(scores - m)                                      # (TB, S, 1)
    attn = e / jnp.sum(e, axis=1, keepdims=True)                 # (TB, S, 1)

    # attended[b, d] = sum_s x[b, s, d] * attn[b, s]  (f32 accumulation).
    attended = jnp.sum(xf * attn, axis=1, keepdims=True)         # (TB, 1, D) f32

    if is_residual:
        o_ref[...] = (xf + attended).astype(o_ref.dtype)
    else:
        o_ref[...] = attended.astype(o_ref.dtype)


def _round_up(x, m):
    return -(-x // m) * m


def _vmem_capacity_bytes():
    """Physical VMEM per TensorCore; conservative 64 MiB if the query fails."""
    try:
        cap = getattr(pltpu.get_tpu_info(), "vmem_capacity_bytes", None)
        if cap:
            return int(cap)
    except Exception:
        pass
    return 64 * 1024 * 1024


def _plan_tiles(B, S, D, dtype, is_residual):
    """Pick (TB, vmem_limit_bytes).

    TB divides B exactly (no pad / no ragged block) and the VMEM-resident
    footprint — lane/sublane-padded, double-buffered in+out tiles plus f32
    temporaries — stays inside a generation-gated scoped-VMEM limit.
    """
    itemsize = jnp.dtype(dtype).itemsize
    sublane = 8 * max(1, 4 // itemsize)        # f32: 8, bf16: 16, int8/fp8: 32
    d_pad = _round_up(D, 128)
    s_in = _round_up(S, sublane)
    s_f32 = _round_up(S, 8)

    in_pb = s_in * d_pad * itemsize                          # input tile, per batch
    out_pb = (s_in if is_residual else sublane) * d_pad * itemsize
    tmp_pb = 2 * s_f32 * d_pad * 4                           # f32 cast + f32 product temps
    per_batch = 2 * in_pb + 2 * out_pb + tmp_pb              # in/out are double-buffered

    vmem_cap = _vmem_capacity_bytes()
    if vmem_cap <= 64 * 1024 * 1024:          # v7x-class: 64 MiB per TensorCore, 2 TCs
        vmem_limit = 48 * 1024 * 1024
        min_steps = 4                         # keep both TensorCores fed
    else:                                     # v5e / v6e: 128 MiB VMEM, 1 TC
        vmem_limit = 96 * 1024 * 1024
        min_steps = 2                         # still want DMA-in / DMA-out overlap

    budget = int(vmem_limit * 0.70)           # headroom for compiler scratch / spills
    tb_cap = max(1, min(budget // per_batch, pl.cdiv(B, min_steps)))

    tb = 1
    for t in range(min(tb_cap, B), 0, -1):    # largest divisor of B under the cap
        if B % t == 0:
            tb = t
            break
    # TODO(synk): if a single batch (S*D) does not fit VMEM, a sequence-tiled
    # online-softmax variant would be needed; not required for this module.
    return tb, vmem_limit


def self_attention(x, weight, bias, *, is_residual=True, attention_activation="relu"):
    """x: (B, S, D), weight: (1, D), bias: (1,).

    Matches the PyTorch module: returns (B, S, D) if is_residual else (B, 1, D).
    """
    B, S, D = x.shape
    use_relu = attention_activation == "relu"

    TB, vmem_limit = _plan_tiles(B, S, D, x.dtype, is_residual)
    n_steps = B // TB
    out_seq = S if is_residual else 1

    kernel = functools.partial(
        _self_attention_kernel, is_residual=is_residual, use_relu=use_relu
    )

    grid_spec = pltpu.PrefetchScalarGridSpec(
        num_scalar_prefetch=0,
        grid=(n_steps,),
        in_specs=[
            pl.BlockSpec((TB, S, D), lambda b: (b, 0, 0)),         # x tile (TB batches)
            pl.BlockSpec((1, D), lambda b: (0, 0)),                # weight, f32, replicated
            pl.BlockSpec(memory_space=pltpu.MemorySpace.SMEM),     # bias scalar in SMEM
        ],
        out_specs=pl.BlockSpec((TB, out_seq, D), lambda b: (b, 0, 0)),
    )

    return pl.pallas_call(
        kernel,
        out_shape=jax.ShapeDtypeStruct((B, out_seq, D), x.dtype),
        grid_spec=grid_spec,
        compiler_params=pltpu.CompilerParams(
            dimension_semantics=("parallel",),
            vmem_limit_bytes=vmem_limit,
        ),
    )(x, weight.astype(jnp.float32), bias.reshape(1, 1).astype(jnp.float32))


def _reference(x, weight, bias, *, is_residual=True, attention_activation="relu"):
    scores = jnp.einsum("bsd,od->bso", x, weight) + bias          # (B, S, 1)
    if attention_activation == "relu":
        scores = jnp.maximum(scores, 0.0)
    else:
        scores = jnp.tanh(scores)
    attn = jax.nn.softmax(scores, axis=1)
    attended = jnp.sum(x * attn, axis=1, keepdims=True)           # (B, 1, D)
    return x + attended if is_residual else attended


if __name__ == "__main__":
    key = jax.random.PRNGKey(0)
    k_x, k_w, k_b, k_x2 = jax.random.split(key, 4)

    B, S, D = 2, 8, 32   # batch, sequence, hidden (input_size = D)

    x = jax.random.normal(k_x, (B, S, D), dtype=jnp.float32)
    # nn.Linear(D, 1): weight (1, D), bias (1,)
    bound = 1.0 / (D ** 0.5)
    weight = jax.random.uniform(k_w, (1, D), jnp.float32, -bound, bound)
    bias = jax.random.uniform(k_b, (1,), jnp.float32, -bound, bound)

    # exact softmax divide + f32 score accumulation -> tight tolerance
    ATOL = RTOL = 1e-4

    # residual + relu
    out = jax.block_until_ready(
        self_attention(x, weight, bias, is_residual=True, attention_activation="relu")
    )
    ref = _reference(x, weight, bias, is_residual=True, attention_activation="relu")
    assert out.shape == (B, S, D), out.shape
    assert jnp.allclose(out, ref, atol=ATOL, rtol=RTOL), float(jnp.max(jnp.abs(out - ref)))

    # non-residual + relu (kernel writes the (B, 1, D) pooled output directly)
    out_nr = jax.block_until_ready(
        self_attention(x, weight, bias, is_residual=False, attention_activation="relu")
    )
    ref_nr = _reference(x, weight, bias, is_residual=False, attention_activation="relu")
    assert out_nr.shape == (B, 1, D), out_nr.shape
    assert jnp.allclose(out_nr, ref_nr, atol=ATOL, rtol=RTOL), float(
        jnp.max(jnp.abs(out_nr - ref_nr))
    )

    # residual + tanh activation
    out_t = jax.block_until_ready(
        self_attention(x, weight, bias, is_residual=True, attention_activation="tanh")
    )
    ref_t = _reference(x, weight, bias, is_residual=True, attention_activation="tanh")
    assert jnp.allclose(out_t, ref_t, atol=ATOL, rtol=RTOL), float(
        jnp.max(jnp.abs(out_t - ref_t))
    )

    # non-power-of-two batch: exercises the divisor-based TB selection (no padding).
    B2 = 6
    x2 = jax.random.normal(k_x2, (B2, S, D), dtype=jnp.float32)
    out2 = jax.block_until_ready(self_attention(x2, weight, bias))
    ref2 = _reference(x2, weight, bias)
    assert out2.shape == (B2, S, D), out2.shape
    assert jnp.allclose(out2, ref2, atol=ATOL, rtol=RTOL), float(jnp.max(jnp.abs(out2 - ref2)))

    print("KERNEL_OK")
</pallas_src>

<mosaic_0001>
module attributes {stable_mosaic.version = 11 : i64} {
  func.func @_self_attention_kernel(%arg0: i32, %arg1: memref<1x8x32xf32, #tpu.memory_space<vmem>>, %arg2: memref<1x32xf32, #tpu.memory_space<vmem>>, %arg3: memref<1x1xf32, #tpu.memory_space<smem>>, %arg4: memref<1x8x32xf32, #tpu.memory_space<vmem>>) attributes {dimension_semantics = [#tpu.dimension_semantics<parallel>], iteration_bounds = array<i64: 2>, scalar_prefetch = 0 : i64, scratch_operands = 0 : i64, tpu.core_type = #tpu.core_type<tc>, window_params = [{transform_indices = @transform_0, window_bounds = array<i64: 1, 8, 32>}, {pipeline_mode = #tpu.pipeline_mode<synchronous>, transform_indices = @transform_1, window_bounds = array<i64: 1, 32>}, {transform_indices = @transform_2, window_bounds = array<i64: 1, 1>}, {transform_indices = @transform_3, window_bounds = array<i64: 1, 8, 32>}]} {
    %c0 = arith.constant 0 : index
    %c0_0 = arith.constant 0 : index
    %c0_1 = arith.constant 0 : index
    %0 = vector.load %arg1[%c0, %c0_0, %c0_1] : memref<1x8x32xf32, #tpu.memory_space<vmem>>, vector<1x8x32xf32>
    %c0_2 = arith.constant 0 : index
    %c0_3 = arith.constant 0 : index
    %1 = vector.load %arg2[%c0_2, %c0_3] : memref<1x32xf32, #tpu.memory_space<vmem>>, vector<1x32xf32>
    %c0_4 = arith.constant 0 : index
    %c0_5 = arith.constant 0 : index
    %2 = memref.load %arg3[%c0_4, %c0_5] : memref<1x1xf32, #tpu.memory_space<smem>>
    %3 = vector.shape_cast %1 : vector<1x32xf32> to vector<1x1x32xf32>
    %4 = vector.broadcast %3 : vector<1x1x32xf32> to vector<1x8x32xf32>
    %5 = arith.mulf %0, %4 : vector<1x8x32xf32>
    %cst = arith.constant dense<0.000000e+00> : vector<1x8xf32>
    %6 = vector.multi_reduction <add>, %5, %cst [2] : vector<1x8x32xf32> to vector<1x8xf32>
    %7 = vector.shape_cast %6 : vector<1x8xf32> to vector<1x8x1xf32>
    %8 = vector.broadcast %2 : f32 to vector<1x8x1xf32>
    %9 = arith.addf %7, %8 : vector<1x8x1xf32>
    %cst_6 = arith.constant 0.000000e+00 : f32
    %10 = vector.broadcast %cst_6 : f32 to vector<1x8x1xf32>
    %11 = arith.maximumf %9, %10 : vector<1x8x1xf32>
    %cst_7 = arith.constant dense<0xFF800000> : vector<1x1xf32>
    %12 = vector.multi_reduction <maximumf>, %11, %cst_7 [1] : vector<1x8x1xf32> to vector<1x1xf32>
    %13 = vector.shape_cast %12 : vector<1x1xf32> to vector<1x1x1xf32>
    %14 = vector.broadcast %13 : vector<1x1x1xf32> to vector<1x8x1xf32>
    %15 = arith.subf %11, %14 : vector<1x8x1xf32>
    %16 = math.exp %15 : vector<1x8x1xf32>
    %cst_8 = arith.constant dense<0.000000e+00> : vector<1x1xf32>
    %17 = vector.multi_reduction <add>, %16, %cst_8 [1] : vector<1x8x1xf32> to vector<1x1xf32>
    %18 = vector.shape_cast %17 : vector<1x1xf32> to vector<1x1x1xf32>
    %19 = vector.broadcast %18 : vector<1x1x1xf32> to vector<1x8x1xf32>
    %20 = arith.divf %16, %19 : vector<1x8x1xf32>
    %21 = vector.broadcast %20 : vector<1x8x1xf32> to vector<1x8x32xf32>
    %22 = arith.mulf %0, %21 : vector<1x8x32xf32>
    %cst_9 = arith.constant dense<0.000000e+00> : vector<1x32xf32>
    %23 = vector.multi_reduction <add>, %22, %cst_9 [1] : vector<1x8x32xf32> to vector<1x32xf32>
    %24 = vector.shape_cast %23 : vector<1x32xf32> to vector<1x1x32xf32>
    %25 = vector.broadcast %24 : vector<1x1x32xf32> to vector<1x8x32xf32>
    %26 = arith.addf %0, %25 : vector<1x8x32xf32>
    %c0_10 = arith.constant 0 : index
    %c0_11 = arith.constant 0 : index
    %c0_12 = arith.constant 0 : index
    %27 = vector.load %arg4[%c0_10, %c0_11, %c0_12] : memref<1x8x32xf32, #tpu.memory_space<vmem>>, vector<1x8x32xf32>
    tpu.vector_store %arg4[%c0_10, %c0_11, %c0_12], %26 {strides = array<i32>} : memref<1x8x32xf32, #tpu.memory_space<vmem>>, vector<1x8x32xf32>,
    return
  }
  func.func @transform_0(%arg0: i32) -> (i32, i32, i32) {
    %c0_i32 = arith.constant 0 : i32
    %c0_i32_0 = arith.constant 0 : i32
    %c0_i32_1 = arith.constant 0 : i32
    return %arg0, %c0_i32, %c0_i32_0 : i32, i32, i32
  }
  func.func @transform_1(%arg0: i32) -> (i32, i32) {
    %c0_i32 = arith.constant 0 : i32
    %c0_i32_0 = arith.constant 0 : i32
    %c0_i32_1 = arith.constant 0 : i32
    return %c0_i32, %c0_i32_0 : i32, i32
  }
  func.func @transform_2(%arg0: i32) -> (i32, i32) {
    %c0_i32 = arith.constant 0 : i32
    %c0_i32_0 = arith.constant 0 : i32
    %c0_i32_1 = arith.constant 0 : i32
    return %c0_i32, %c0_i32_0 : i32, i32
  }
  func.func @transform_3(%arg0: i32) -> (i32, i32, i32) {
    %c0_i32 = arith.constant 0 : i32
    %c0_i32_0 = arith.constant 0 : i32
    %c0_i32_1 = arith.constant 0 : i32
    return %arg0, %c0_i32, %c0_i32_0 : i32, i32, i32
  }
}

</mosaic_0001>

<llo_original>
// kernel: tpu_custom_call.1
$region0: #{tpu_custom_call.1}
  #allocation0 [shape = 'u32[]', space=smem, size = 0x4, offset = 0x4, fixed_abs, tag = 'smem constant byte address 0x4 - core index']
  #allocation1 [shape = 'u32[144,128]{1,0:T(1,128)}', space=vmem, size = 0x12000, scoped, tag = 'internal scratch']
  #allocation2 [shape = 'f32[1,1]{1,0:T(1,128)S(6)}', space=smem, size = 0x200, scoped, tag = 'scoped memory for tpu_custom_call.1']
  %s0 = inlined_call_operand.hbm [shape: f32[2,8,32], index: 0, kind: input, shape index: {}]
  %s1 = inlined_call_operand.vmem [shape: f32[1,32], index: 1, kind: input, shape index: {}]
  %s2 = inlined_call_operand.<no memory space> [shape: f32[1,1], index: 2, kind: input, shape index: {}]
  %s3 = inlined_call_operand.hbm [shape: f32[2,8,32], index: 3, kind: output, shape index: {}]
  %s4 = sld [smem:[#allocation0]]
  $region49: #{tpu_custom_call.1} parent=0
    _
  %s6 = ssub.s32 1, %s4
  %s7 = scalar_select 0, %s6, %s4
  %8 = sst [smem:[#allocation2]] %s2
  $region1: #{tpu_custom_call.1} parent=0
    #allocation3 [shape = 'u8[8192]{0}', space=vmem, size = 0x2000, scoped, tag = 'input window, operand 0']
    #allocation4 [shape = 's32[2]{0}', space=sflag, size = 0x8, scoped, tag = 'scoped memory for tpu_custom_call.1']
    #allocation5 [shape = 's32[2]{0}', space=sflag, size = 0x8, scoped, tag = 'scoped memory for tpu_custom_call.1']
    #allocation6 [shape = 'u8[8192]{0}', space=vmem, size = 0x2000, scoped, tag = 'output window, operand 0']
    %9 = vsyncpa [#allocation4], 0
    %s10 = scalar_lea.sflag [#allocation4], 1
    %11 = vsyncpa %s10, 0
    %12 = vsyncpa [#allocation5], 0
    %s13 = scalar_lea.sflag [#allocation5], 1
    %14 = vsyncpa %s13, 0
    loop: start=0, step=1, limit=4
    $region2: #{tpu_custom_call.1} parent=1 // loop_pre_header
      _
    $region3: #{tpu_custom_call.1} parent=1 // loop_header
      %s16 = sphi 0, %s20
      %p17 = scmp.ge.s32.totalorder %s16, 4
      %s26 = sphi 0, %s28
      %s29 = sphi 0, %s26
      %s30 = sphi 0, %s29
      %s46 = sphi 0, %s30
      %s50 = sphi 0, %s50
      %s52 = sphi 0, %s50
      %s53 = sphi 0, %s52
      %s67 = sphi 0, %s53
      %s71 = sphi 0, %s71
      %s73 = sphi 0, %s71
      %s74 = sphi 0, %s73
      %s88 = sphi 0, %s74
      %s94 = sphi 0, %s96
      %s97 = sphi 0, %s94
      %s98 = sphi 0, %s97
      %s114 = sphi 0, %s98
    $region4: #{tpu_custom_call.1} parent=1 // loop_header_branch
      %19 = sbr.rel (%p17) target = $region8
    $region5: #{tpu_custom_call.1} parent=1 // loop_body
      %s21 = ssub.s32 %s16, 1
      %s22 = ssub.s32 %s16, 2
      %s23 = sadd.s32 %s16, 1
      %s24 = ssub.s32 %s16, %s23
      %p25 = scmp.eq.s32.totalorder %s24, 0
      %s27 = sadd.s32 %s26, 1
      %s28 = scalar_select %p25, %s26, %s27
      %p31 = pneg %p25
      %p32 = scmp.eq.s32.totalorder %s16, 1
      %p33 = por %p31, %p32
      %p34 = scmp.ne.s32.totalorder %s26, %s29
      %p35 = scmp.eq.s32.totalorder %s16, 0
      %p36 = por %p34, %p35
      %p37 = scmp.ne.s32.totalorder %s26, %s29
      %p38 = scmp.eq.s32.totalorder %s21, 1
      %p39 = por %p37, %p38
      %p40 = scmp.ne.s32.totalorder %s29, %s30
      %p41 = scmp.eq.s32.totalorder %s21, 0
      %p42 = por %p40, %p41
      %p43 = scmp.ne.s32.totalorder %s29, %s30
      %p44 = scmp.eq.s32.totalorder %s22, 1
      %p45 = por %p43, %p44
      %p47 = scmp.ne.s32.totalorder %s30, %s46
      %p48 = scmp.eq.s32.totalorder %s22, 0
      %p49 = por %p47, %p48
      %s51 = sadd.s32 %s50, 1
      %p54 = scmp.eq.s32.totalorder %s16, 1
      %p55 = scmp.ne.s32.totalorder %s50, %s52
      %p56 = scmp.eq.s32.totalorder %s16, 0
      %p57 = por %p55, %p56
      %p58 = scmp.ne.s32.totalorder %s50, %s52
      %p59 = scmp.eq.s32.totalorder %s21, 1
      %p60 = por %p58, %p59
      %p61 = scmp.ne.s32.totalorder %s52, %s53
      %p62 = scmp.eq.s32.totalorder %s21, 0
      %p63 = por %p61, %p62
      %p64 = scmp.ne.s32.totalorder %s52, %s53
      %p65 = scmp.eq.s32.totalorder %s22, 1
      %p66 = por %p64, %p65
      %p68 = scmp.ne.s32.totalorder %s53, %s67
      %p69 = scmp.eq.s32.totalorder %s22, 0
      %p70 = por %p68, %p69
      %s72 = sadd.s32 %s71, 1
      %p75 = scmp.eq.s32.totalorder %s16, 1
      %p76 = scmp.ne.s32.totalorder %s71, %s73
      %p77 = scmp.eq.s32.totalorder %s16, 0
      %p78 = por %p76, %p77
      %p79 = scmp.ne.s32.totalorder %s71, %s73
      %p80 = scmp.eq.s32.totalorder %s21, 1
      %p81 = por %p79, %p80
      %p82 = scmp.ne.s32.totalorder %s73, %s74
      %p83 = scmp.eq.s32.totalorder %s21, 0
      %p84 = por %p82, %p83
      %p85 = scmp.ne.s32.totalorder %s73, %s74
      %p86 = scmp.eq.s32.totalorder %s22, 1
      %p87 = por %p85, %p86
      %p89 = scmp.ne.s32.totalorder %s74, %s88
      %p90 = scmp.eq.s32.totalorder %s22, 0
      %p91 = por %p89, %p90
      %s92 = ssub.s32 %s16, %s23
      %p93 = scmp.eq.s32.totalorder %s92, 0
      %s95 = sadd.s32 %s94, 1
      %s96 = scalar_select %p93, %s94, %s95
      %p99 = pneg %p93
      %p100 = scmp.eq.s32.totalorder %s16, 1
      %p101 = por %p99, %p100
      %p102 = scmp.ne.s32.totalorder %s94, %s97
      %p103 = scmp.eq.s32.totalorder %s16, 0
      %p104 = por %p102, %p103
      %p105 = scmp.ne.s32.totalorder %s94, %s97
      %p106 = scmp.eq.s32.totalorder %s21, 1
      %p107 = por %p105, %p106
      %p108 = scmp.ne.s32.totalorder %s97, %s98
      %p109 = scmp.eq.s32.totalorder %s21, 0
      %p110 = por %p108, %p109
      %p111 = scmp.ne.s32.totalorder %s97, %s98
      %p112 = scmp.eq.s32.totalorder %s22, 1
      %p113 = por %p111, %p112
      %p115 = scmp.ne.s32.totalorder %s98, %s114
      %p116 = scmp.eq.s32.totalorder %s22, 0
      %p117 = por %p115, %p116
      %p118 = scmp.le.s32.totalorder 1, %s16
      %p119 = scmp.lt.s32.totalorder %s16, 3
      %p120 = pnand %p118, %p119
      %p121 = pneg %p120
      // Predicated region
      $region9: #{tpu_custom_call.1} parent=5 // pred_check
        _
      $region10: #{tpu_custom_call.1} parent=5 // pred_check_branch
        %123 = sbr.rel (%p120) target = $region12
      $region11: #{tpu_custom_call.1} parent=5 // pred_region
        %s124 = ssub.s32 %s16, 1
        // Predicated region
        $region13: #{tpu_custom_call.1} parent=11 // pred_check
          %p125 = pneg %p63
        $region14: #{tpu_custom_call.1} parent=11 // pred_check_branch
          %127 = sbr.rel (%p125) target = $region16
        $region15: #{tpu_custom_call.1} parent=11 // pred_region
          _
        $region16: #{tpu_custom_call.1} parent=11 // pred_fallthru
          _
        // Predicated region
        $region17: #{tpu_custom_call.1} parent=11 // pred_check
          %p128 = pneg %p84
        $region18: #{tpu_custom_call.1} parent=11 // pred_check_branch
          %130 = sbr.rel (%p128) target = $region20
        $region19: #{tpu_custom_call.1} parent=11 // pred_region
          _
        $region20: #{tpu_custom_call.1} parent=11 // pred_fallthru
          _
      $region12: #{tpu_custom_call.1} parent=5 // pred_fallthru
        _
      %p131 = scmp.lt.s32.totalorder %s16, 2
      // Predicated region
      $region21: #{tpu_custom_call.1} parent=5 // pred_check
        %p132 = pneg %p131
      $region22: #{tpu_custom_call.1} parent=5 // pred_check_branch
        %134 = sbr.rel (%p132) target = $region24
      $region23: #{tpu_custom_call.1} parent=5 // pred_region
        // Predicated region
        $region25: #{tpu_custom_call.1} parent=23 // pred_check
          %p135 = pneg %p36
        $region26: #{tpu_custom_call.1} parent=23 // pred_check_branch
          %137 = sbr.rel (%p135) target = $region28
        $region27: #{tpu_custom_call.1} parent=23 // pred_region
          %s138 = sand.u32 %s26, 1
          %s139 = scalar_lea.sflag [#allocation4], %s138
          %s140 = sand.u32 %s26, 1
          %s141 = smul.addr %s140, 8
          %s142 = scalar_lea.vmem [#allocation3], %s141
          %s144 = ssub.s32 128, 128
          %145 = vsyncadd %s139, %s144
          %s146 = smul.addr %s16, 128
          %s147 = scalar_lea.hbm %s0, %s146
          %s149 = sshll.u32 %s142, 4
          %s150 = int_to_ptr.vmem [resolvable:$true] %s149
          %152 = dma.hbm_to_vmem [thread:$0]  %s147, 128, %s150, %s139
        $region28: #{tpu_custom_call.1} parent=23 // pred_fallthru
          _
      $region24: #{tpu_custom_call.1} parent=5 // pred_fallthru
        _
      %p153 = scmp.le.s32.totalorder 1, %s16
      %p154 = scmp.lt.s32.totalorder %s16, 3
      %p155 = pnand %p153, %p154
      %p156 = pneg %p155
      // Predicated region
      $region29: #{tpu_custom_call.1} parent=5 // pred_check
        _
      $region30: #{tpu_custom_call.1} parent=5 // pred_check_branch
        %158 = sbr.rel (%p155) target = $region32
      $region31: #{tpu_custom_call.1} parent=5 // pred_region
        %s159 = ssub.s32 %s16, 1
        %s160 = sand.u32 %s29, 1
        %s161 = scalar_lea.sflag [#allocation4], %s160
        %s162 = sand.u32 %s29, 1
        %s163 = smul.addr %s162, 8
        %s164 = scalar_lea.vmem [#allocation3], %s163
        // Predicated region
        $region33: #{tpu_custom_call.1} parent=31 // pred_check
          %p165 = pneg %p42
        $region34: #{tpu_custom_call.1} parent=31 // pred_check_branch
          %167 = sbr.rel (%p165) target = $region36
        $region35: #{tpu_custom_call.1} parent=31 // pred_region
          %168 = dma.done %s161, 128
        $region36: #{tpu_custom_call.1} parent=31 // pred_fallthru
          _
        %s169 = sand.u32 %s29, 1
        %s170 = scalar_lea.sflag [#allocation4], %s169
        %s171 = sand.u32 %s29, 1
        %s172 = smul.addr %s171, 8
        %s173 = scalar_lea.vmem [#allocation3], %s172
        %p174 = pneg %p42
        %p175 = pneg %p39
        %p176 = pneg %p63
        %p177 = pneg %p60
        %p178 = pneg %p84
        %p179 = pneg %p81
        %p180 = pneg %p110
        %p181 = pneg %p107
        %s182 = sand.u32 %s97, 1
        %s183 = scalar_lea.sflag [#allocation5], %s182
        %s184 = sand.u32 %s97, 1
        %s185 = smul.addr %s184, 8
        %s186 = scalar_lea.vmem [#allocation6], %s185
        %v187 = vld [vmem:[%s164] sm:$0xff]
        %v188 = vld [vmem:[%s1] sm:$0x1]
        %s189 = sld [smem:[#allocation2]]
        %v191 = vlaneseq
        %v192 = vshrl.u32 %v191, 7
        %v193 = vsub.s32 0, %v192
        %v194 = vrot.slane %v188, %v193
        %v196 = vmul.f32 %v187, %v194
        %vm197 = vcmask 261120
        %v198 = vsel %vm197, %v196, 0.0
        %199 = vadd.xlane.f32.xlu0 %v198
        %v200 = vpop.xlane.xlu0 %199
        %v201 = vstv %s189
        %v202 = vadd.f32 %v200, %v201
        %v203 = vmax.f32 %v202, 0.0
        %v204 = vrot.slane %v203, 4
        %v205 = vmax.f32 %v203, %v204
        %v206 = vrot.slane %v205, 2
        %v207 = vmax.f32 %v205, %v206
        %v208 = vrot.slane %v207, 1
        %v209 = vmax.f32 %v207, %v208
        %v210 = vsub.f32 %v203, %v209
        %v211 = vmul.f32 %v210, 1.442695
        %v212 = vpow.pop %v211
        %v213 = vrot.slane %v212, 4
        %v214 = vadd.f32 %v212, %v213
        %v215 = vrot.slane %v214, 2
        %v216 = vadd.f32 %v214, %v215
        %v217 = vrot.slane %v216, 1
        %v218 = vadd.f32 %v216, %v217
        %v219 = vrcp.pop %v218
        %v220 = vmul.f32 %v212, %v219
        %v221 = vmul.f32 %v187, %v220
        %v222 = vsel %vm197, %v221, 0.0
        %v223 = vrot.slane %v222, 4
        %v224 = vadd.f32 %v222, %v223
        %v225 = vrot.slane %v224, 2
        %v226 = vadd.f32 %v224, %v225
        %v227 = vrot.slane %v226, 1
        %v228 = vadd.f32 %v226, %v227
        %v229 = vadd.f32 %v187, %v228
        %230 = vst.msk [vmem:[%s186] sm:$0xff] %vm197, %v229
        %s231 = sand.u32 %s97, 1
        %s232 = scalar_lea.sflag [#allocation5], %s231
        %s233 = sand.u32 %s97, 1
        %s234 = smul.addr %s233, 8
        %s235 = scalar_lea.vmem [#allocation6], %s234
        // Predicated region
        $region37: #{tpu_custom_call.1} parent=31 // pred_check
          %p236 = pneg %p107
        $region38: #{tpu_custom_call.1} parent=31 // pred_check_branch
          %238 = sbr.rel (%p236) target = $region40
        $region39: #{tpu_custom_call.1} parent=31 // pred_region
          %s240 = ssub.s32 128, 128
          %241 = vsyncadd %s232, %s240
          %s242 = smul.addr %s21, 128
          %s243 = scalar_lea.hbm %s3, %s242
          %s245 = sshll.u32 %s235, 4
          %s246 = int_to_ptr.vmem [resolvable:$true] %s245
          %248 = dma.vmem_to_hbm [thread:$0]  %s246, 128, %s243, %s232
        $region40: #{tpu_custom_call.1} parent=31 // pred_fallthru
          _
      $region32: #{tpu_custom_call.1} parent=5 // pred_fallthru
        _
      %p249 = scmp.le.s32.totalorder 2, %s16
      // Predicated region
      $region41: #{tpu_custom_call.1} parent=5 // pred_check
        %p250 = pneg %p249
      $region42: #{tpu_custom_call.1} parent=5 // pred_check_branch
        %252 = sbr.rel (%p250) target = $region44
      $region43: #{tpu_custom_call.1} parent=5 // pred_region
        %s253 = ssub.s32 %s16, 2
        // Predicated region
        $region45: #{tpu_custom_call.1} parent=43 // pred_check
          %p254 = pneg %p113
        $region46: #{tpu_custom_call.1} parent=43 // pred_check_branch
          %256 = sbr.rel (%p254) target = $region48
        $region47: #{tpu_custom_call.1} parent=43 // pred_region
          %s257 = sand.u32 %s98, 1
          %s258 = scalar_lea.sflag [#allocation5], %s257
          %s259 = sand.u32 %s98, 1
          %s260 = smul.addr %s259, 8
          %s261 = scalar_lea.vmem [#allocation6], %s260
          %262 = dma.done %s258, 128
        $region48: #{tpu_custom_call.1} parent=43 // pred_fallthru
          _
      $region44: #{tpu_custom_call.1} parent=5 // pred_fallthru
        _
    $region6: #{tpu_custom_call.1} parent=1 // loop_footer
      %s20 = sadd.s32 1, %s16
    $region7: #{tpu_custom_call.1} parent=1 // loop_footer_branch
      %15 = sbr.rel target = $region3
    $region8: #{tpu_custom_call.1} parent=1 // loop_exit
      _
    %263 = vsyncpa [#allocation4], 1
    %s264 = scalar_lea.sflag [#allocation4], 1
    %265 = vsyncpa %s264, 1
    %266 = vsyncpa [#allocation5], 1
    %s267 = scalar_lea.sflag [#allocation5], 1
    %268 = vsyncpa %s267, 1

</llo_original>
